<compile_context>
chip_gen: v7x
topology: tpu7x:2x2x1
jax: 0.10.0
libtpu: 0.0.40
codegen_flags: <defaults>
</compile_context>

<pallas_src>
import numpy as np
import jax
import jax.numpy as jnp
from jax import lax
from jax.experimental import pallas as pl
from jax.experimental.pallas import tpu as pltpu


def _round_up(x, m):
    return ((x + m - 1) // m) * m


def _upsample_kernel(starts_ref,                 # scalar-prefetch (SMEM); used only by index_maps
                     ce0_ref, ci0_ref, f0_ref,   # band window 0: cum_excl / cum_incl / features
                     ce1_ref, ci1_ref, f1_ref,   # band window 1 (next TK block)
                     out_ref):
    del starts_ref
    TM = out_ref.shape[1]
    m0 = pl.program_id(1) * TM

    # Output-row index *within this tile*; cumsums are shifted by -m0 so the gather
    # slab is built with 2 compares + 1 AND + 1 convert over (TM, TK).
    rows = lax.broadcasted_iota(jnp.int32, (TM, 1), 0)            # (TM, 1)

    def band(ce_ref, ci_ref, f_ref):
        f = f_ref[0]                                              # (TK, D)
        ce = ce_ref[0] - m0                                       # (1, TK) exclusive cumsum
        ci = ci_ref[0] - m0                                       # (1, TK) inclusive cumsum
        # g[m, t] == 1 iff cum_excl[t] <= m0 + m < cum_incl[t]  (0/1 exact in bf16/f32)
        g = ((rows >= ce) & (rows < ci)).astype(f.dtype)          # (TM, TK)
        return jnp.dot(g, f, preferred_element_type=out_ref.dtype)

    # Every output row is covered by exactly one source frame, which lives in exactly
    # one of the two disjoint adjacent windows, so the sum is exact (other term is 0).
    out_ref[0] = band(ce0_ref, ci0_ref, f0_ref) + band(ce1_ref, ci1_ref, f1_ref)


def feature_upsampler(fused_features, fused_masks, duration, max_mel_len, tm=256):
    """JAX/Pallas equivalent of FeatureUpsampler.forward (max_mel_len required).

    fused_features: (B, T, D) float (f32 or bf16)
    fused_masks:    (B, T, 1) bool
    duration:       (B, T, 1) int (repeat counts per source frame)
    max_mel_len:    python int (output time length M)
    Returns (features (B, M, D), masks (B, M, 1) bool, len_pred (B,) int32).
    """
    B, T, D = fused_features.shape
    M = int(max_mel_len)

    dur = jnp.maximum(duration.reshape(B, T).astype(jnp.int32), 0)   # clamp: insurance
    cum_incl = jnp.cumsum(dur, axis=1)                               # (B, T) inclusive
    len_pred = cum_incl[:, -1].astype(jnp.int32)                     # (B,)

    # ---- masks + len_pred handled in the wrapper (cheap searchsorted gather) ----
    m_range = jnp.arange(M, dtype=jnp.int32)
    src_idx = jax.vmap(
        lambda ci: jnp.searchsorted(ci, m_range, side='right'))(cum_incl)      # (B, M)
    src_idx = jnp.minimum(src_idx, T - 1)
    gathered_mask = jnp.take_along_axis(fused_masks[..., 0], src_idx, axis=1)  # (B, M)
    valid = m_range[None, :] < len_pred[:, None]
    masks_out = jnp.where(valid, gathered_mask, True)[..., None]               # (B, M, 1)

    # ---- tile sizes ----
    TM = _round_up(max(8, min(int(tm), _round_up(M, 8))), 8)   # output-time tile
    TK = max(128, _round_up(TM, 128))                          # source window (>= TM, lane-dense)
    n_m = (M + TM - 1) // TM                                   # ragged last tile handled by Pallas

    # ---- compact zero-duration frames + pad T (lane-dense, + one guard block) ----
    T_pad = _round_up(T, TK) + TK
    n_t_blocks = T_pad // TK
    perm = jnp.argsort((dur == 0).astype(jnp.int32), axis=1, stable=True)      # (B, T)
    dur_c = jnp.take_along_axis(dur, perm, axis=1)
    dur_cp = jnp.pad(dur_c, ((0, 0), (0, T_pad - T)))                          # pad frames: dur 0
    cum_incl_c = jnp.cumsum(dur_cp, axis=1)                                    # (B, T_pad)
    cum_excl_c = cum_incl_c - dur_cp
    perm_p = jnp.pad(perm, ((0, 0), (0, T_pad - T)))                           # pad -> frame 0 (values unused)
    feat_c = jnp.take_along_axis(fused_features, perm_p[:, :, None], axis=1)   # (B, T_pad, D)

    # ---- per-(b, m-tile) source block starts (scalar prefetch) ----
    m_tile_starts = jnp.arange(n_m, dtype=jnp.int32) * TM                      # (n_m,)
    c_start = jax.vmap(
        lambda ci: jnp.searchsorted(ci, m_tile_starts, side='right'))(cum_incl_c)
    starts = jnp.minimum(c_start // TK, n_t_blocks - 2).astype(jnp.int32)      # (B, n_m)
    starts = starts.reshape(-1)                                                # flat SMEM table

    ce3 = cum_excl_c.reshape(B, 1, T_pad)
    ci3 = cum_incl_c.reshape(B, 1, T_pad)

    cum_spec0 = pl.BlockSpec((1, 1, TK), lambda b, m, s: (b, 0, s[b * n_m + m]))
    feat_spec0 = pl.BlockSpec((1, TK, D), lambda b, m, s: (b, s[b * n_m + m], 0))
    cum_spec1 = pl.BlockSpec((1, 1, TK), lambda b, m, s: (b, 0, s[b * n_m + m] + 1))
    feat_spec1 = pl.BlockSpec((1, TK, D), lambda b, m, s: (b, s[b * n_m + m] + 1, 0))

    feat_out = pl.pallas_call(
        _upsample_kernel,
        out_shape=jax.ShapeDtypeStruct((B, M, D), fused_features.dtype),
        grid_spec=pltpu.PrefetchScalarGridSpec(
            num_scalar_prefetch=1,
            grid=(B, n_m),                   # m innermost: starts are non-decreasing,
            in_specs=[                       # so windows re-DMA only when they advance
                cum_spec0, cum_spec0, feat_spec0,
                cum_spec1, cum_spec1, feat_spec1,
            ],
            out_specs=pl.BlockSpec((1, TM, D), lambda b, m, s: (b, m, 0)),
        ),
        compiler_params=pltpu.CompilerParams(
            dimension_semantics=("parallel", "parallel")),
    )(starts, ce3, ci3, feat_c, ce3, ci3, feat_c)

    return feat_out, masks_out, len_pred


def _reference_numpy(features, masks, duration, max_mel_len):
    """Direct NumPy port of the PyTorch forward (for verification)."""
    features = np.asarray(features)
    masks = np.asarray(masks)
    B, T, D = features.shape
    dur = np.asarray(duration).reshape(B, T).astype(np.int32)
    feats, msks, lens = [], [], []
    for b in range(B):
        f = np.repeat(features[b], dur[b], axis=0)
        m = np.repeat(masks[b], dur[b], axis=0)
        lens.append(f.shape[0])
        pad = max_mel_len - f.shape[0]
        f = np.pad(f, ((0, pad), (0, 0)), constant_values=0.0)
        m = np.pad(m, ((0, pad), (0, 0)), constant_values=True)
        feats.append(f)
        msks.append(m)
    return np.stack(feats), np.stack(msks), np.array(lens, np.int32)


if __name__ == "__main__":
    B, T, D = 2, 8, 32

    key = jax.random.PRNGKey(0)
    k_feat, k_mask, k_dur = jax.random.split(key, 3)

    fused_features = jax.random.normal(k_feat, (B, T, D), dtype=jnp.float32)
    fused_masks = jax.random.bernoulli(k_mask, 0.3, (B, T, 1))          # bool
    duration = jax.random.randint(k_dur, (B, T, 1), 0, 5).astype(jnp.int32)

    # max_mel_len=None semantics: use the max total repeated length.
    dur_np = np.asarray(duration).reshape(B, T)
    max_mel_len = int(dur_np.sum(axis=1).max())

    feats, msks, lens = feature_upsampler(
        fused_features, fused_masks, duration, max_mel_len)
    jax.block_until_ready((feats, msks, lens))

    # Verify against a NumPy port of the PyTorch forward.
    ref_f, ref_m, ref_l = _reference_numpy(
        fused_features, fused_masks, duration, max_mel_len)
    np.testing.assert_allclose(np.asarray(feats), ref_f, rtol=1e-6, atol=1e-6)
    np.testing.assert_array_equal(np.asarray(msks), ref_m)
    np.testing.assert_array_equal(np.asarray(lens), ref_l)

    # TODO(synk): max_mel_len=None (data-dependent output length) has no static-shape
    # Pallas equivalent; the wrapper requires max_mel_len as a python int.
    print("KERNEL_OK")
</pallas_src>

<mosaic_0001>
module attributes {stable_mosaic.version = 11 : i64} {
  func.func @_upsample_kernel(%arg0: i32, %arg1: i32, %arg2: memref<2xi32, #tpu.memory_space<smem>>, %arg3: memref<1x1x128xi32, #tpu.memory_space<vmem>>, %arg4: memref<1x1x128xi32, #tpu.memory_space<vmem>>, %arg5: memref<1x128x32xf32, #tpu.memory_space<vmem>>, %arg6: memref<1x1x128xi32, #tpu.memory_space<vmem>>, %arg7: memref<1x1x128xi32, #tpu.memory_space<vmem>>, %arg8: memref<1x128x32xf32, #tpu.memory_space<vmem>>, %arg9: memref<1x24x32xf32, #tpu.memory_space<vmem>>) attributes {dimension_semantics = [#tpu.dimension_semantics<parallel>, #tpu.dimension_semantics<parallel>], iteration_bounds = array<i64: 2, 1>, scalar_prefetch = 1 : i64, scratch_operands = 0 : i64, tpu.core_type = #tpu.core_type<tc>, window_params = [{transform_indices = @transform_0, window_bounds = array<i64: 1, 1, 128>}, {transform_indices = @transform_1, window_bounds = array<i64: 1, 1, 128>}, {transform_indices = @transform_2, window_bounds = array<i64: 1, 128, 32>}, {transform_indices = @transform_3, window_bounds = array<i64: 1, 1, 128>}, {transform_indices = @transform_4, window_bounds = array<i64: 1, 1, 128>}, {transform_indices = @transform_5, window_bounds = array<i64: 1, 128, 32>}, {transform_indices = @transform_6, window_bounds = array<i64: 1, 24, 32>}]} {
    %c24_i32 = arith.constant 24 : i32
    %0 = arith.muli %arg1, %c24_i32 : i32
    %1 = tpu.iota {dimensions = array<i32: 0>} : vector<24x1xi32>
    %c0 = arith.constant 0 : index
    %c0_0 = arith.constant 0 : index
    %c0_1 = arith.constant 0 : index
    %2 = vector.load %arg5[%c0, %c0_0, %c0_1] : memref<1x128x32xf32, #tpu.memory_space<vmem>>, vector<1x128x32xf32>
    %3 = vector.shape_cast %2 : vector<1x128x32xf32> to vector<128x32xf32>
    %c0_2 = arith.constant 0 : index
    %c0_3 = arith.constant 0 : index
    %c0_4 = arith.constant 0 : index
    %4 = vector.load %arg3[%c0_2, %c0_3, %c0_4] : memref<1x1x128xi32, #tpu.memory_space<vmem>>, vector<1x1x128xi32>
    %5 = vector.shape_cast %4 : vector<1x1x128xi32> to vector<1x128xi32>
    %6 = vector.broadcast %0 : i32 to vector<1x128xi32>
    %7 = arith.subi %5, %6 : vector<1x128xi32>
    %c0_5 = arith.constant 0 : index
    %c0_6 = arith.constant 0 : index
    %c0_7 = arith.constant 0 : index
    %8 = vector.load %arg4[%c0_5, %c0_6, %c0_7] : memref<1x1x128xi32, #tpu.memory_space<vmem>>, vector<1x1x128xi32>
    %9 = vector.shape_cast %8 : vector<1x1x128xi32> to vector<1x128xi32>
    %10 = vector.broadcast %0 : i32 to vector<1x128xi32>
    %11 = arith.subi %9, %10 : vector<1x128xi32>
    %12 = vector.broadcast %1 : vector<24x1xi32> to vector<24x128xi32>
    %13 = vector.broadcast %7 : vector<1x128xi32> to vector<24x128xi32>
    %14 = arith.cmpi sge, %12, %13 : vector<24x128xi32>
    %15 = vector.broadcast %1 : vector<24x1xi32> to vector<24x128xi32>
    %16 = vector.broadcast %11 : vector<1x128xi32> to vector<24x128xi32>
    %17 = arith.cmpi slt, %15, %16 : vector<24x128xi32>
    %18 = arith.andi %14, %17 : vector<24x128xi1>
    %19 = arith.extui %18 : vector<24x128xi1> to vector<24x128xi32>
    %20 = arith.sitofp %19 : vector<24x128xi32> to vector<24x128xf32>
    %cst = arith.constant dense<0.000000e+00> : vector<24x32xf32>
    %21 = tpu.matmul %20, %3, %cst {dimension_numbers = #tpu.dot_dimension_numbers<[1], [0], [0], [1], [0, 0, 1, 1], [], []>} : vector<24x128xf32>, vector<128x32xf32>, vector<24x32xf32> -> vector<24x32xf32>
    %c0_8 = arith.constant 0 : index
    %c0_9 = arith.constant 0 : index
    %c0_10 = arith.constant 0 : index
    %22 = vector.load %arg8[%c0_8, %c0_9, %c0_10] : memref<1x128x32xf32, #tpu.memory_space<vmem>>, vector<1x128x32xf32>
    %23 = vector.shape_cast %22 : vector<1x128x32xf32> to vector<128x32xf32>
    %c0_11 = arith.constant 0 : index
    %c0_12 = arith.constant 0 : index
    %c0_13 = arith.constant 0 : index
    %24 = vector.load %arg6[%c0_11, %c0_12, %c0_13] : memref<1x1x128xi32, #tpu.memory_space<vmem>>, vector<1x1x128xi32>
    %25 = vector.shape_cast %24 : vector<1x1x128xi32> to vector<1x128xi32>
    %26 = vector.broadcast %0 : i32 to vector<1x128xi32>
    %27 = arith.subi %25, %26 : vector<1x128xi32>
    %c0_14 = arith.constant 0 : index
    %c0_15 = arith.constant 0 : index
    %c0_16 = arith.constant 0 : index
    %28 = vector.load %arg7[%c0_14, %c0_15, %c0_16] : memref<1x1x128xi32, #tpu.memory_space<vmem>>, vector<1x1x128xi32>
    %29 = vector.shape_cast %28 : vector<1x1x128xi32> to vector<1x128xi32>
    %30 = vector.broadcast %0 : i32 to vector<1x128xi32>
    %31 = arith.subi %29, %30 : vector<1x128xi32>
    %32 = vector.broadcast %1 : vector<24x1xi32> to vector<24x128xi32>
    %33 = vector.broadcast %27 : vector<1x128xi32> to vector<24x128xi32>
    %34 = arith.cmpi sge, %32, %33 : vector<24x128xi32>
    %35 = vector.broadcast %1 : vector<24x1xi32> to vector<24x128xi32>
    %36 = vector.broadcast %31 : vector<1x128xi32> to vector<24x128xi32>
    %37 = arith.cmpi slt, %35, %36 : vector<24x128xi32>
    %38 = arith.andi %34, %37 : vector<24x128xi1>
    %39 = arith.extui %38 : vector<24x128xi1> to vector<24x128xi32>
    %40 = arith.sitofp %39 : vector<24x128xi32> to vector<24x128xf32>
    %cst_17 = arith.constant dense<0.000000e+00> : vector<24x32xf32>
    %41 = tpu.matmul %40, %23, %cst_17 {dimension_numbers = #tpu.dot_dimension_numbers<[1], [0], [0], [1], [0, 0, 1, 1], [], []>} : vector<24x128xf32>, vector<128x32xf32>, vector<24x32xf32> -> vector<24x32xf32>
    %42 = arith.addf %21, %41 : vector<24x32xf32>
    %c0_18 = arith.constant 0 : index
    %c0_19 = arith.constant 0 : index
    %c0_20 = arith.constant 0 : index
    %43 = vector.load %arg9[%c0_18, %c0_19, %c0_20] : memref<1x24x32xf32, #tpu.memory_space<vmem>>, vector<1x24x32xf32>
    %44 = vector.shape_cast %43 : vector<1x24x32xf32> to vector<24x32xf32>
    %45 = vector.shape_cast %42 : vector<24x32xf32> to vector<1x24x32xf32>
    tpu.vector_store %arg9[%c0_18, %c0_19, %c0_20], %45 {strides = array<i32>} : memref<1x24x32xf32, #tpu.memory_space<vmem>>, vector<1x24x32xf32>,
    return
  }
  func.func @transform_0(%arg0: i32, %arg1: i32, %arg2: memref<2xi32, #tpu.memory_space<smem>>) -> (i32, i32, i32) {
    %c1_i32 = arith.constant 1 : i32
    %0 = arith.muli %arg0, %c1_i32 : i32
    %1 = arith.addi %0, %arg1 : i32
    %2 = arith.index_cast %1 : i32 to index
    %3 = memref.load %arg2[%2] : memref<2xi32, #tpu.memory_space<smem>>
    %c0_i32 = arith.constant 0 : i32
    %c0_i32_0 = arith.constant 0 : i32
    return %arg0, %c0_i32, %3 : i32, i32, i32
  }
  func.func @transform_1(%arg0: i32, %arg1: i32, %arg2: memref<2xi32, #tpu.memory_space<smem>>) -> (i32, i32, i32) {
    %c1_i32 = arith.constant 1 : i32
    %0 = arith.muli %arg0, %c1_i32 : i32
    %1 = arith.addi %0, %arg1 : i32
    %2 = arith.index_cast %1 : i32 to index
    %3 = memref.load %arg2[%2] : memref<2xi32, #tpu.memory_space<smem>>
    %c0_i32 = arith.constant 0 : i32
    %c0_i32_0 = arith.constant 0 : i32
    return %arg0, %c0_i32, %3 : i32, i32, i32
  }
  func.func @transform_2(%arg0: i32, %arg1: i32, %arg2: memref<2xi32, #tpu.memory_space<smem>>) -> (i32, i32, i32) {
    %c1_i32 = arith.constant 1 : i32
    %0 = arith.muli %arg0, %c1_i32 : i32
    %1 = arith.addi %0, %arg1 : i32
    %2 = arith.index_cast %1 : i32 to index
    %3 = memref.load %arg2[%2] : memref<2xi32, #tpu.memory_space<smem>>
    %c0_i32 = arith.constant 0 : i32
    %c0_i32_0 = arith.constant 0 : i32
    return %arg0, %3, %c0_i32 : i32, i32, i32
  }
  func.func @transform_3(%arg0: i32, %arg1: i32, %arg2: memref<2xi32, #tpu.memory_space<smem>>) -> (i32, i32, i32) {
    %c1_i32 = arith.constant 1 : i32
    %0 = arith.muli %arg0, %c1_i32 : i32
    %1 = arith.addi %0, %arg1 : i32
    %2 = arith.index_cast %1 : i32 to index
    %3 = memref.load %arg2[%2] : memref<2xi32, #tpu.memory_space<smem>>
    %c1_i32_0 = arith.constant 1 : i32
    %4 = arith.addi %3, %c1_i32_0 : i32
    %c0_i32 = arith.constant 0 : i32
    %c0_i32_1 = arith.constant 0 : i32
    return %arg0, %c0_i32, %4 : i32, i32, i32
  }
  func.func @transform_4(%arg0: i32, %arg1: i32, %arg2: memref<2xi32, #tpu.memory_space<smem>>) -> (i32, i32, i32) {
    %c1_i32 = arith.constant 1 : i32
    %0 = arith.muli %arg0, %c1_i32 : i32
    %1 = arith.addi %0, %arg1 : i32
    %2 = arith.index_cast %1 : i32 to index
    %3 = memref.load %arg2[%2] : memref<2xi32, #tpu.memory_space<smem>>
    %c1_i32_0 = arith.constant 1 : i32
    %4 = arith.addi %3, %c1_i32_0 : i32
    %c0_i32 = arith.constant 0 : i32
    %c0_i32_1 = arith.constant 0 : i32
    return %arg0, %c0_i32, %4 : i32, i32, i32
  }
  func.func @transform_5(%arg0: i32, %arg1: i32, %arg2: memref<2xi32, #tpu.memory_space<smem>>) -> (i32, i32, i32) {
    %c1_i32 = arith.constant 1 : i32
    %0 = arith.muli %arg0, %c1_i32 : i32
    %1 = arith.addi %0, %arg1 : i32
    %2 = arith.index_cast %1 : i32 to index
    %3 = memref.load %arg2[%2] : memref<2xi32, #tpu.memory_space<smem>>
    %c1_i32_0 = arith.constant 1 : i32
    %4 = arith.addi %3, %c1_i32_0 : i32
    %c0_i32 = arith.constant 0 : i32
    %c0_i32_1 = arith.constant 0 : i32
    return %arg0, %4, %c0_i32 : i32, i32, i32
  }
  func.func @transform_6(%arg0: i32, %arg1: i32, %arg2: memref<2xi32, #tpu.memory_space<smem>>) -> (i32, i32, i32) {
    %c0_i32 = arith.constant 0 : i32
    %c0_i32_0 = arith.constant 0 : i32
    return %arg0, %arg1, %c0_i32 : i32, i32, i32
  }
}

</mosaic_0001>

<llo_original>
// kernel: tpu_custom_call.1
$region0: #{tpu_custom_call.1}
  #allocation0 [shape = 'u32[]', space=smem, size = 0x4, offset = 0x4, fixed_abs, tag = 'smem constant byte address 0x4 - core index']
  #allocation1 [shape = 'u32[144,128]{1,0:T(1,128)}', space=vmem, size = 0x12000, scoped, tag = 'internal scratch']
  #allocation2 [shape = 's32[1]{0}', space=sflag, size = 0x4, scoped, tag = 'scoped memory for tpu_custom_call.1']
  #allocation3 [shape = 'u8[512]{0}', space=smem, size = 0x200, scoped, tag = 'prefetched SMEM operand 0']
  %s0 = inlined_call_operand.vmem [shape: s32[2], index: 0, kind: input, shape index: {}]
  %s1 = inlined_call_operand.vmem [shape: s32[2,1,256], index: 1, kind: input, shape index: {}]
  %s2 = inlined_call_operand.vmem [shape: s32[2,1,256], index: 2, kind: input, shape index: {}]
  %s3 = inlined_call_operand.vmem [shape: f32[2,256,32], index: 3, kind: input, shape index: {}]
  %s4 = inlined_call_operand.vmem [shape: s32[2,1,256], index: 4, kind: input, shape index: {}]
  %s5 = inlined_call_operand.vmem [shape: s32[2,1,256], index: 5, kind: input, shape index: {}]
  %s6 = inlined_call_operand.vmem [shape: f32[2,256,32], index: 6, kind: input, shape index: {}]
  %s7 = inlined_call_operand.vmem [shape: f32[2,21,32], index: 7, kind: output, shape index: {}]
  %s8 = sld [smem:[#allocation0]]
  $region57: #{tpu_custom_call.1} parent=0
    _
  %s10 = ssub.s32 1, %s8
  %s11 = scalar_select 0, %s10, %s8
  %s12 = sshll.u32 %s0, 4
  %s13 = int_to_ptr.vmem [resolvable:$true] %s12
  %15 = dma.vmem_to_smem %s13, 16, [#allocation3], [#allocation2]
  %16 = dma.done [#allocation2], 16
  %17 = sfence
  loop: start=0, step=1, limit=4
  $region2: #{tpu_custom_call.1} parent=0 // loop_pre_header
    _
  $region3: #{tpu_custom_call.1} parent=0 // loop_header
    %s19 = sphi 0, %s23
    %p20 = scmp.ge.s32.totalorder %s19, 4
    %s26 = sphi 0, %s38
    %s27 = sphi 0, %s34
    %s28 = sphi 0, %s26
    %s29 = sphi 0, %s27
    %s30 = sphi 0, %s28
    %s31 = sphi 0, %s29
    %s47 = sphi 0, %s49
    %s50 = sphi 0, %s47
    %s51 = sphi 0, %s50
    %s67 = sphi 0, %s51
    %s79 = sphi 0, %s81
    %s82 = sphi 0, %s79
    %s83 = sphi 0, %s82
    %s99 = sphi 0, %s83
    %s111 = sphi 0, %s113
    %s114 = sphi 0, %s111
    %s115 = sphi 0, %s114
    %s131 = sphi 0, %s115
    %s145 = sphi 0, %s147
    %s148 = sphi 0, %s145
    %s149 = sphi 0, %s148
    %s165 = sphi 0, %s149
    %s179 = sphi 0, %s181
    %s182 = sphi 0, %s179
    %s183 = sphi 0, %s182
    %s199 = sphi 0, %s183
    %s213 = sphi 0, %s215
    %s216 = sphi 0, %s213
    %s217 = sphi 0, %s216
    %s233 = sphi 0, %s217
    %s241 = sphi 0, %s243
    %s244 = sphi 0, %s241
    %s245 = sphi 0, %s244
    %s261 = sphi 0, %s245
  $region4: #{tpu_custom_call.1} parent=0 // loop_header_branch
    %22 = sbr.rel (%p20) target = $region8
  $region5: #{tpu_custom_call.1} parent=0 // loop_body
    %s24 = ssub.s32 %s19, 1
    %s25 = ssub.s32 %s19, 2
    %s32 = sadd.s32 1, %s27
    %p33 = scmp.ge.s32.totalorder %s32, 1
    %s34 = scalar_select %p33, 0, %s32
    %s35 = sadd.s32 1, %s26
    %s36 = scalar_select %p33, %s35, %s26
    %p37 = scmp.ge.s32.totalorder %s36, 2
    %s38 = scalar_select %p37, 0, %s36
    %s39 = sadd.s32 %s26, %s27
    %s40 = sld [smem:[#allocation3 + %s39]]
    %s41 = sadd.s32 %s38, %s34
    %s42 = sld [smem:[#allocation3 + %s41]]
    %s43 = ssub.s32 %s26, %s38
    %s44 = ssub.s32 %s40, %s42
    %s45 = sor.u32 %s43, %s44
    %p46 = scmp.eq.s32.totalorder %s45, 0
    %s48 = sadd.s32 %s47, 1
    %s49 = scalar_select %p46, %s47, %s48
    %p52 = pneg %p46
    %p53 = scmp.eq.s32.totalorder %s19, 1
    %p54 = por %p52, %p53
    %p55 = scmp.ne.s32.totalorder %s47, %s50
    %p56 = scmp.eq.s32.totalorder %s19, 0
    %p57 = por %p55, %p56
    %p58 = scmp.ne.s32.totalorder %s47, %s50
    %p59 = scmp.eq.s32.totalorder %s24, 1
    %p60 = por %p58, %p59
    %p61 = scmp.ne.s32.totalorder %s50, %s51
    %p62 = scmp.eq.s32.totalorder %s24, 0
    %p63 = por %p61, %p62
    %p64 = scmp.ne.s32.totalorder %s50, %s51
    %p65 = scmp.eq.s32.totalorder %s25, 1
    %p66 = por %p64, %p65
    %p68 = scmp.ne.s32.totalorder %s51, %s67
    %p69 = scmp.eq.s32.totalorder %s25, 0
    %p70 = por %p68, %p69
    %s71 = sadd.s32 %s26, %s27
    %s72 = sld [smem:[#allocation3 + %s71]]
    %s73 = sadd.s32 %s38, %s34
    %s74 = sld [smem:[#allocation3 + %s73]]
    %s75 = ssub.s32 %s26, %s38
    %s76 = ssub.s32 %s72, %s74
    %s77 = sor.u32 %s75, %s76
    %p78 = scmp.eq.s32.totalorder %s77, 0
    %s80 = sadd.s32 %s79, 1
    %s81 = scalar_select %p78, %s79, %s80
    %p84 = pneg %p78
    %p85 = scmp.eq.s32.totalorder %s19, 1
    %p86 = por %p84, %p85
    %p87 = scmp.ne.s32.totalorder %s79, %s82
    %p88 = scmp.eq.s32.totalorder %s19, 0
    %p89 = por %p87, %p88
    %p90 = scmp.ne.s32.totalorder %s79, %s82
    %p91 = scmp.eq.s32.totalorder %s24, 1
    %p92 = por %p90, %p91
    %p93 = scmp.ne.s32.totalorder %s82, %s83
    %p94 = scmp.eq.s32.totalorder %s24, 0
    %p95 = por %p93, %p94
    %p96 = scmp.ne.s32.totalorder %s82, %s83
    %p97 = scmp.eq.s32.totalorder %s25, 1
    %p98 = por %p96, %p97
    %p100 = scmp.ne.s32.totalorder %s83, %s99
    %p101 = scmp.eq.s32.totalorder %s25, 0
    %p102 = por %p100, %p101
    %s103 = sadd.s32 %s26, %s27
    %s104 = sld [smem:[#allocation3 + %s103]]
    %s105 = sadd.s32 %s38, %s34
    %s106 = sld [smem:[#allocation3 + %s105]]
    %s107 = ssub.s32 %s26, %s38
    %s108 = ssub.s32 %s104, %s106
    %s109 = sor.u32 %s107, %s108
    %p110 = scmp.eq.s32.totalorder %s109, 0
    %s112 = sadd.s32 %s111, 1
    %s113 = scalar_select %p110, %s111, %s112
    %p116 = pneg %p110
    %p117 = scmp.eq.s32.totalorder %s19, 1
    %p118 = por %p116, %p117
    %p119 = scmp.ne.s32.totalorder %s111, %s114
    %p120 = scmp.eq.s32.totalorder %s19, 0
    %p121 = por %p119, %p120
    %p122 = scmp.ne.s32.totalorder %s111, %s114
    %p123 = scmp.eq.s32.totalorder %s24, 1
    %p124 = por %p122, %p123
    %p125 = scmp.ne.s32.totalorder %s114, %s115
    %p126 = scmp.eq.s32.totalorder %s24, 0
    %p127 = por %p125, %p126
    %p128 = scmp.ne.s32.totalorder %s114, %s115
    %p129 = scmp.eq.s32.totalorder %s25, 1
    %p130 = por %p128, %p129
    %p132 = scmp.ne.s32.totalorder %s115, %s131
    %p133 = scmp.eq.s32.totalorder %s25, 0
    %p134 = por %p132, %p133
    %s135 = sadd.s32 %s26, %s27
    %s136 = sld [smem:[#allocation3 + %s135]]
    %s137 = sadd.s32 %s136, 1
    %s138 = sadd.s32 %s38, %s34
    %s139 = sld [smem:[#allocation3 + %s138]]
    %s140 = sadd.s32 %s139, 1
    %s141 = ssub.s32 %s26, %s38
    %s142 = ssub.s32 %s137, %s140
    %s143 = sor.u32 %s141, %s142
    %p144 = scmp.eq.s32.totalorder %s143, 0
    %s146 = sadd.s32 %s145, 1
    %s147 = scalar_select %p144, %s145, %s146
    %p150 = pneg %p144
    %p151 = scmp.eq.s32.totalorder %s19, 1
    %p152 = por %p150, %p151
    %p153 = scmp.ne.s32.totalorder %s145, %s148
    %p154 = scmp.eq.s32.totalorder %s19, 0
    %p155 = por %p153, %p154
    %p156 = scmp.ne.s32.totalorder %s145, %s148
    %p157 = scmp.eq.s32.totalorder %s24, 1
    %p158 = por %p156, %p157
    %p159 = scmp.ne.s32.totalorder %s148, %s149
    %p160 = scmp.eq.s32.totalorder %s24, 0
    %p161 = por %p159, %p160
    %p162 = scmp.ne.s32.totalorder %s148, %s149
    %p163 = scmp.eq.s32.totalorder %s25, 1
    %p164 = por %p162, %p163
    %p166 = scmp.ne.s32.totalorder %s149, %s165
    %p167 = scmp.eq.s32.totalorder %s25, 0
    %p168 = por %p166, %p167
    %s169 = sadd.s32 %s26, %s27
    %s170 = sld [smem:[#allocation3 + %s169]]
    %s171 = sadd.s32 %s170, 1
    %s172 = sadd.s32 %s38, %s34
    %s173 = sld [smem:[#allocation3 + %s172]]
    %s174 = sadd.s32 %s173, 1
    %s175 = ssub.s32 %s26, %s38
    %s176 = ssub.s32 %s171, %s174
    %s177 = sor.u32 %s175, %s176
    %p178 = scmp.eq.s32.totalorder %s177, 0
    %s180 = sadd.s32 %s179, 1
    %s181 = scalar_select %p178, %s179, %s180
    %p184 = pneg %p178
    %p185 = scmp.eq.s32.totalorder %s19, 1
    %p186 = por %p184, %p185
    %p187 = scmp.ne.s32.totalorder %s179, %s182
    %p188 = scmp.eq.s32.totalorder %s19, 0
    %p189 = por %p187, %p188
    %p190 = scmp.ne.s32.totalorder %s179, %s182
    %p191 = scmp.eq.s32.totalorder %s24, 1
    %p192 = por %p190, %p191
    %p193 = scmp.ne.s32.totalorder %s182, %s183
    %p194 = scmp.eq.s32.totalorder %s24, 0
    %p195 = por %p193, %p194
    %p196 = scmp.ne.s32.totalorder %s182, %s183
    %p197 = scmp.eq.s32.totalorder %s25, 1
    %p198 = por %p196, %p197
    %p200 = scmp.ne.s32.totalorder %s183, %s199
    %p201 = scmp.eq.s32.totalorder %s25, 0
    %p202 = por %p200, %p201
    %s203 = sadd.s32 %s26, %s27
    %s204 = sld [smem:[#allocation3 + %s203]]
    %s205 = sadd.s32 %s204, 1
    %s206 = sadd.s32 %s38, %s34
    %s207 = sld [smem:[#allocation3 + %s206]]
    %s208 = sadd.s32 %s207, 1
    %s209 = ssub.s32 %s26, %s38
    %s210 = ssub.s32 %s205, %s208
    %s211 = sor.u32 %s209, %s210
    %p212 = scmp.eq.s32.totalorder %s211, 0
    %s214 = sadd.s32 %s213, 1
    %s215 = scalar_select %p212, %s213, %s214
    %p218 = pneg %p212
    %p219 = scmp.eq.s32.totalorder %s19, 1
    %p220 = por %p218, %p219
    %p221 = scmp.ne.s32.totalorder %s213, %s216
    %p222 = scmp.eq.s32.totalorder %s19, 0
    %p223 = por %p221, %p222
    %p224 = scmp.ne.s32.totalorder %s213, %s216
    %p225 = scmp.eq.s32.totalorder %s24, 1
    %p226 = por %p224, %p225
    %p227 = scmp.ne.s32.totalorder %s216, %s217
    %p228 = scmp.eq.s32.totalorder %s24, 0
    %p229 = por %p227, %p228
    %p230 = scmp.ne.s32.totalorder %s216, %s217
    %p231 = scmp.eq.s32.totalorder %s25, 1
    %p232 = por %p230, %p231
    %p234 = scmp.ne.s32.totalorder %s217, %s233
    %p235 = scmp.eq.s32.totalorder %s25, 0
    %p236 = por %p234, %p235
    %s237 = ssub.s32 %s26, %s38
    %s238 = ssub.s32 %s27, %s34
    %s239 = sor.u32 %s237, %s238
    %p240 = scmp.eq.s32.totalorder %s239, 0
    %s242 = sadd.s32 %s241, 1
    %s243 = scalar_select %p240, %s241, %s242
    %p246 = pneg %p240
    %p247 = scmp.eq.s32.totalorder %s19, 1
    %p248 = por %p246, %p247
    %p249 = scmp.ne.s32.totalorder %s241, %s244
    %p250 = scmp.eq.s32.totalorder %s19, 0
    %p251 = por %p249, %p250
    %p252 = scmp.ne.s32.totalorder %s241, %s244
    %p253 = scmp.eq.s32.totalorder %s24, 1
    %p254 = por %p252, %p253
    %p255 = scmp.ne.s32.totalorder %s244, %s245
    %p256 = scmp.eq.s32.totalorder %s24, 0
    %p257 = por %p255, %p256
    %p258 = scmp.ne.s32.totalorder %s244, %s245
    %p259 = scmp.eq.s32.totalorder %s25, 1
    %p260 = por %p258, %p259
    %p262 = scmp.ne.s32.totalorder %s245, %s261
    %p263 = scmp.eq.s32.totalorder %s25, 0
    %p264 = por %p262, %p263
    %p265 = scmp.le.s32.totalorder 1, %s19
    %p266 = scmp.lt.s32.totalorder %s19, 3
    %p267 = pnand %p265, %p266
    %p268 = pneg %p267
    // Predicated region
    $region9: #{tpu_custom_call.1} parent=5 // pred_check
      _
    $region10: #{tpu_custom_call.1} parent=5 // pred_check_branch
      %270 = sbr.rel (%p267) target = $region12
    $region11: #{tpu_custom_call.1} parent=5 // pred_region
      %s271 = ssub.s32 %s19, 1
    $region12: #{tpu_custom_call.1} parent=5 // pred_fallthru
      _
    %p272 = scmp.lt.s32.totalorder %s19, 2
    // Predicated region
    $region13: #{tpu_custom_call.1} parent=5 // pred_check
      %p273 = pneg %p272
    $region14: #{tpu_custom_call.1} parent=5 // pred_check_branch
      %275 = sbr.rel (%p273) target = $region16
    $region15: #{tpu_custom_call.1} parent=5 // pred_region
      // Predicated region
      $region17: #{tpu_custom_call.1} parent=15 // pred_check
        %p276 = pneg %p57
      $region18: #{tpu_custom_call.1} parent=15 // pred_check_branch
        %278 = sbr.rel (%p276) target = $region20
      $region19: #{tpu_custom_call.1} parent=15 // pred_region
        %s279 = sadd.s32 %s26, %s27
        %s280 = sld [smem:[#allocation3 + %s279]]
        %p281 = scmp.lt.s32.totalorder %s26, 1
        %s282 = scalar_select %p281, %s26, 1
        %p283 = scmp.lt.s32.totalorder %s280, 1
        %s284 = scalar_select %p283, %s280, 1
        %s285 = smul.addr %s282, 2
        %s286 = sadd.s32 %s284, %s285
        %s287 = scalar_lea.vmem %s1, %s286
        %s288 = sadd.s32 %s26, %s27
        %s289 = sld [smem:[#allocation3 + %s288]]
      $region20: #{tpu_custom_call.1} parent=15 // pred_fallthru
        _
      // Predicated region
      $region21: #{tpu_custom_call.1} parent=15 // pred_check
        %p290 = pneg %p89
      $region22: #{tpu_custom_call.1} parent=15 // pred_check_branch
        %292 = sbr.rel (%p290) target = $region24
      $region23: #{tpu_custom_call.1} parent=15 // pred_region
        %s293 = sadd.s32 %s26, %s27
        %s294 = sld [smem:[#allocation3 + %s293]]
        %p295 = scmp.lt.s32.totalorder %s26, 1
        %s296 = scalar_select %p295, %s26, 1
        %p297 = scmp.lt.s32.totalorder %s294, 1
        %s298 = scalar_select %p297, %s294, 1
        %s299 = smul.addr %s296, 2
        %s300 = sadd.s32 %s298, %s299
        %s301 = scalar_lea.vmem %s2, %s300
        %s302 = sadd.s32 %s26, %s27
        %s303 = sld [smem:[#allocation3 + %s302]]
      $region24: #{tpu_custom_call.1} parent=15 // pred_fallthru
        _
      // Predicated region
      $region25: #{tpu_custom_call.1} parent=15 // pred_check
        %p304 = pneg %p121
      $region26: #{tpu_custom_call.1} parent=15 // pred_check_branch
        %306 = sbr.rel (%p304) target = $region28
      $region27: #{tpu_custom_call.1} parent=15 // pred_region
        %s307 = sadd.s32 %s26, %s27
        %s308 = sld [smem:[#allocation3 + %s307]]
        %s309 = smul.u32 16, %s308
        %p310 = scmp.lt.s32.totalorder %s26, 1
        %s311 = scalar_select %p310, %s26, 1
        %p312 = scmp.lt.s32.totalorder %s309, 31
        %s313 = scalar_select %p312, %s309, 31
        %s314 = smul.addr %s311, 32
        %s315 = sadd.s32 %s313, %s314
        %s316 = smul.addr %s315, 8
        %s317 = scalar_lea.vmem %s3, %s316
        %s318 = sadd.s32 %s26, %s27
        %s319 = sld [smem:[#allocation3 + %s318]]
        %s320 = smul.u32 16, %s319
      $region28: #{tpu_custom_call.1} parent=15 // pred_fallthru
        _
      // Predicated region
      $region29: #{tpu_custom_call.1} parent=15 // pred_check
        %p321 = pneg %p155
      $region30: #{tpu_custom_call.1} parent=15 // pred_check_branch
        %323 = sbr.rel (%p321) target = $region32
      $region31: #{tpu_custom_call.1} parent=15 // pred_region
        %s324 = sadd.s32 %s26, %s27
        %s325 = sld [smem:[#allocation3 + %s324]]
        %s326 = sadd.s32 %s325, 1
        %p327 = scmp.lt.s32.totalorder %s26, 1
        %s328 = scalar_select %p327, %s26, 1
        %p329 = scmp.lt.s32.totalorder %s326, 1
        %s330 = scalar_select %p329, %s326, 1
        %s331 = smul.addr %s328, 2
        %s332 = sadd.s32 %s330, %s331
        %s333 = scalar_lea.vmem %s4, %s332
        %s334 = sadd.s32 %s26, %s27
        %s335 = sld [smem:[#allocation3 + %s334]]
        %s336 = sadd.s32 %s335, 1
      $region32: #{tpu_custom_call.1} parent=15 // pred_fallthru
        _
      // Predicated region
      $region33: #{tpu_custom_call.1} parent=15 // pred_check
        %p337 = pneg %p189
      $region34: #{tpu_custom_call.1} parent=15 // pred_check_branch
        %339 = sbr.rel (%p337) target = $region36
      $region35: #{tpu_custom_call.1} parent=15 // pred_region
        %s340 = sadd.s32 %s26, %s27
        %s341 = sld [smem:[#allocation3 + %s340]]
        %s342 = sadd.s32 %s341, 1
        %p343 = scmp.lt.s32.totalorder %s26, 1
        %s344 = scalar_select %p343, %s26, 1
        %p345 = scmp.lt.s32.totalorder %s342, 1
        %s346 = scalar_select %p345, %s342, 1
        %s347 = smul.addr %s344, 2
        %s348 = sadd.s32 %s346, %s347
        %s349 = scalar_lea.vmem %s5, %s348
        %s350 = sadd.s32 %s26, %s27
        %s351 = sld [smem:[#allocation3 + %s350]]
        %s352 = sadd.s32 %s351, 1
      $region36: #{tpu_custom_call.1} parent=15 // pred_fallthru
        _
      // Predicated region
      $region37: #{tpu_custom_call.1} parent=15 // pred_check
        %p353 = pneg %p223
      $region38: #{tpu_custom_call.1} parent=15 // pred_check_branch
        %355 = sbr.rel (%p353) target = $region40
      $region39: #{tpu_custom_call.1} parent=15 // pred_region
        %s356 = sadd.s32 %s26, %s27
        %s357 = sld [smem:[#allocation3 + %s356]]
        %s358 = sadd.s32 %s357, 1
        %s359 = smul.u32 16, %s358
        %p360 = scmp.lt.s32.totalorder %s26, 1
        %s361 = scalar_select %p360, %s26, 1
        %p362 = scmp.lt.s32.totalorder %s359, 31
        %s363 = scalar_select %p362, %s359, 31
        %s364 = smul.addr %s361, 32
        %s365 = sadd.s32 %s363, %s364
        %s366 = smul.addr %s365, 8
        %s367 = scalar_lea.vmem %s6, %s366
        %s368 = sadd.s32 %s26, %s27
        %s369 = sld [smem:[#allocation3 + %s368]]
        %s370 = sadd.s32 %s369, 1
        %s371 = smul.u32 16, %s370
      $region40: #{tpu_custom_call.1} parent=15 // pred_fallthru
        _
    $region16: #{tpu_custom_call.1} parent=5 // pred_fallthru
      _
    %p372 = scmp.le.s32.totalorder 1, %s19
    %p373 = scmp.lt.s32.totalorder %s19, 3
    %p374 = pnand %p372, %p373
    %p375 = pneg %p374
    // Predicated region
    $region41: #{tpu_custom_call.1} parent=5 // pred_check
      _
    $region42: #{tpu_custom_call.1} parent=5 // pred_check_branch
      %377 = sbr.rel (%p374) target = $region44
    $region43: #{tpu_custom_call.1} parent=5 // pred_region
      %s378 = ssub.s32 %s19, 1
      %s379 = sadd.s32 %s28, %s29
      %s380 = sld [smem:[#allocation3 + %s379]]
      %p381 = scmp.lt.s32.totalorder %s28, 1
      %s382 = scalar_select %p381, %s28, 1
      %p383 = scmp.lt.s32.totalorder %s380, 1
      %s384 = scalar_select %p383, %s380, 1
      %s385 = smul.addr %s382, 2
      %s386 = sadd.s32 %s384, %s385
      %s387 = scalar_lea.vmem %s1, %s386
      %p388 = pneg %p63
      %p389 = pneg %p60
      %s390 = sadd.s32 %s28, %s29
      %s391 = sld [smem:[#allocation3 + %s390]]
      %p392 = scmp.lt.s32.totalorder %s28, 1
      %s393 = scalar_select %p392, %s28, 1
      %p394 = scmp.lt.s32.totalorder %s391, 1
      %s395 = scalar_select %p394, %s391, 1
      %s396 = smul.addr %s393, 2
      %s397 = sadd.s32 %s395, %s396
      %s398 = scalar_lea.vmem %s2, %s397
      %p399 = pneg %p95
      %p400 = pneg %p92
      %s401 = sadd.s32 %s28, %s29
      %s402 = sld [smem:[#allocation3 + %s401]]
      %s403 = smul.u32 16, %s402
      %p404 = scmp.lt.s32.totalorder %s28, 1
      %s405 = scalar_select %p404, %s28, 1
      %p406 = scmp.lt.s32.totalorder %s403, 31
      %s407 = scalar_select %p406, %s403, 31
      %s408 = smul.addr %s405, 32
      %s409 = sadd.s32 %s407, %s408
      %s410 = smul.addr %s409, 8
      %s411 = scalar_lea.vmem %s3, %s410
      %p412 = pneg %p127
      %p413 = pneg %p124
      %s414 = sadd.s32 %s28, %s29
      %s415 = sld [smem:[#allocation3 + %s414]]
      %s416 = sadd.s32 %s415, 1
      %p417 = scmp.lt.s32.totalorder %s28, 1
      %s418 = scalar_select %p417, %s28, 1
      %p419 = scmp.lt.s32.totalorder %s416, 1
      %s420 = scalar_select %p419, %s416, 1
      %s421 = smul.addr %s418, 2
      %s422 = sadd.s32 %s420, %s421
      %s423 = scalar_lea.vmem %s4, %s422
      %p424 = pneg %p161
      %p425 = pneg %p158
      %s426 = sadd.s32 %s28, %s29
      %s427 = sld [smem:[#allocation3 + %s426]]
      %s428 = sadd.s32 %s427, 1
      %p429 = scmp.lt.s32.totalorder %s28, 1
      %s430 = scalar_select %p429, %s28, 1
      %p431 = scmp.lt.s32.totalorder %s428, 1
      %s432 = scalar_select %p431, %s428, 1
      %s433 = smul.addr %s430, 2
      %s434 = sadd.s32 %s432, %s433
      %s435 = scalar_lea.vmem %s5, %s434
      %p436 = pneg %p195
      %p437 = pneg %p192
      %s438 = sadd.s32 %s28, %s29
      %s439 = sld [smem:[#allocation3 + %s438]]
      %s440 = sadd.s32 %s439, 1
      %s441 = smul.u32 16, %s440
      %p442 = scmp.lt.s32.totalorder %s28, 1
      %s443 = scalar_select %p442, %s28, 1
      %p444 = scmp.lt.s32.totalorder %s441, 31
      %s445 = scalar_select %p444, %s441, 31
      %s446 = smul.addr %s443, 32
      %s447 = sadd.s32 %s445, %s446
      %s448 = smul.addr %s447, 8
      %s449 = scalar_lea.vmem %s6, %s448
      %p450 = pneg %p229
      %p451 = pneg %p226
      %p452 = pneg %p257
      %p453 = pneg %p254
      %s454 = smul.u32 3, %s29
      %p455 = scmp.lt.s32.totalorder %s28, 1
      %s456 = scalar_select %p455, %s28, 1
      %p457 = scmp.lt.s32.totalorder %s454, 2
      %s458 = scalar_select %p457, %s454, 2
      %s459 = smul.addr %s456, 3
      %s460 = sadd.s32 %s458, %s459
      %s461 = smul.addr %s460, 8
      %s462 = scalar_lea.vmem %s7, %s461
      %s463 = sadd.s32 %s28, %s29
      %s464 = sld [smem:[#allocation3 + %s463]]
      %p465 = scmp.lt.s32.totalorder %s28, 1
      %s466 = scalar_select %p465, %s28, 1
      %p467 = scmp.lt.s32.totalorder %s464, 1
      %s468 = scalar_select %p467, %s464, 1
      %s469 = smul.addr %s466, 2
      %s470 = sadd.s32 %s468, %s469
      %s471 = scalar_lea.vmem %s1, %s470
      %s472 = sadd.s32 %s28, %s29
      %s473 = sld [smem:[#allocation3 + %s472]]
      %s474 = sadd.s32 %s28, %s29
      %s475 = sld [smem:[#allocation3 + %s474]]
      %p476 = scmp.lt.s32.totalorder %s28, 1
      %s477 = scalar_select %p476, %s28, 1
      %p478 = scmp.lt.s32.totalorder %s475, 1
      %s479 = scalar_select %p478, %s475, 1
      %s480 = smul.addr %s477, 2
      %s481 = sadd.s32 %s479, %s480
      %s482 = scalar_lea.vmem %s2, %s481
      %s483 = sadd.s32 %s28, %s29
      %s484 = sld [smem:[#allocation3 + %s483]]
      %s485 = sadd.s32 %s28, %s29
      %s486 = sld [smem:[#allocation3 + %s485]]
      %s487 = smul.u32 16, %s486
      %p488 = scmp.lt.s32.totalorder %s28, 1
      %s489 = scalar_select %p488, %s28, 1
      %p490 = scmp.lt.s32.totalorder %s487, 31
      %s491 = scalar_select %p490, %s487, 31
      %s492 = smul.addr %s489, 32
      %s493 = sadd.s32 %s491, %s492
      %s494 = smul.addr %s493, 8
      %s495 = scalar_lea.vmem %s3, %s494
      %s496 = sadd.s32 %s28, %s29
      %s497 = sld [smem:[#allocation3 + %s496]]
      %s498 = smul.u32 16, %s497
      %s499 = sadd.s32 %s28, %s29
      %s500 = sld [smem:[#allocation3 + %s499]]
      %s501 = sadd.s32 %s500, 1
      %p502 = scmp.lt.s32.totalorder %s28, 1
      %s503 = scalar_select %p502, %s28, 1
      %p504 = scmp.lt.s32.totalorder %s501, 1
      %s505 = scalar_select %p504, %s501, 1
      %s506 = smul.addr %s503, 2
      %s507 = sadd.s32 %s505, %s506
      %s508 = scalar_lea.vmem %s4, %s507
      %s509 = sadd.s32 %s28, %s29
      %s510 = sld [smem:[#allocation3 + %s509]]
      %s511 = sadd.s32 %s510, 1
      %s512 = sadd.s32 %s28, %s29
      %s513 = sld [smem:[#allocation3 + %s512]]
      %s514 = sadd.s32 %s513, 1
      %p515 = scmp.lt.s32.totalorder %s28, 1
      %s516 = scalar_select %p515, %s28, 1
      %p517 = scmp.lt.s32.totalorder %s514, 1
      %s518 = scalar_select %p517, %s514, 1
      %s519 = smul.addr %s516, 2
      %s520 = sadd.s32 %s518, %s519
      %s521 = scalar_lea.vmem %s5, %s520
      %s522 = sadd.s32 %s28, %s29
      %s523 = sld [smem:[#allocation3 + %s522]]
      %s524 = sadd.s32 %s523, 1
      %s525 = sadd.s32 %s28, %s29
      %s526 = sld [smem:[#allocation3 + %s525]]
      %s527 = sadd.s32 %s526, 1
      %s528 = smul.u32 16, %s527
      %p529 = scmp.lt.s32.totalorder %s28, 1
      %s530 = scalar_select %p529, %s28, 1
      %p531 = scmp.lt.s32.totalorder %s528, 31
      %s532 = scalar_select %p531, %s528, 31
      %s533 = smul.addr %s530, 32
      %s534 = sadd.s32 %s532, %s533
      %s535 = smul.addr %s534, 8
      %s536 = scalar_lea.vmem %s6, %s535
      %s537 = sadd.s32 %s28, %s29
      %s538 = sld [smem:[#allocation3 + %s537]]
      %s539 = sadd.s32 %s538, 1
      %s540 = smul.u32 16, %s539
      %s541 = smul.u32 3, %s29
      %p542 = scmp.lt.s32.totalorder %s28, 1
      %s543 = scalar_select %p542, %s28, 1
      %p544 = scmp.lt.s32.totalorder %s541, 2
      %s545 = scalar_select %p544, %s541, 2
      %s546 = smul.addr %s543, 3
      %s547 = sadd.s32 %s545, %s546
      %s548 = smul.addr %s547, 8
      %s549 = scalar_lea.vmem %s7, %s548
      %s550 = smul.u32 3, %s29
      %s551 = smul.u32 %s29, 24
      %v552 = vlaneseq
      %v553 = vshrl.u32 %v552, 7
      %v554 = vadd.s32 %v553, 8
      %v555 = vadd.s32 %v553, 16
      %v556 = vld [vmem:[%s495] sm:$0xff]
      %v557 = vld [vmem:[%s495 + $0x8] sm:$0xff]
      %v558 = vld [vmem:[%s495 + $0x10] sm:$0xff]
      %v559 = vld [vmem:[%s495 + $0x18] sm:$0xff]
      %v560 = vld [vmem:[%s495 + $0x20] sm:$0xff]
      %v561 = vld [vmem:[%s495 + $0x28] sm:$0xff]
      %v562 = vld [vmem:[%s495 + $0x30] sm:$0xff]
      %v563 = vld [vmem:[%s495 + $0x38] sm:$0xff]
      %v564 = vld [vmem:[%s495 + $0x40] sm:$0xff]
      %v565 = vld [vmem:[%s495 + $0x48] sm:$0xff]
      %v566 = vld [vmem:[%s495 + $0x50] sm:$0xff]
      %v567 = vld [vmem:[%s495 + $0x58] sm:$0xff]
      %v568 = vld [vmem:[%s495 + $0x60] sm:$0xff]
      %v569 = vld [vmem:[%s495 + $0x68] sm:$0xff]
      %v570 = vld [vmem:[%s495 + $0x70] sm:$0xff]
      %v571 = vld [vmem:[%s495 + $0x78] sm:$0xff]
      %v572 = vld [vmem:[%s471] sm:$0x1]
      %v573 = vstv %s551
      %v574 = vsub.s32 %v572, %v573
      %v575 = vld [vmem:[%s482] sm:$0x1]
      %v576 = vsub.s32 %v575, %v573
      %v577 = vlaneseq
      %v578 = vshrl.u32 %v577, 7
      %v579 = vsub.s32 0, %v578
      %v580 = vrot.slane %v574, %v579
      %vm581 = vcmp.ge.s32.totalorder %v553, %v580
      %vm582 = vcmp.ge.s32.totalorder %v554, %v580
      %vm583 = vcmp.ge.s32.totalorder %v555, %v580
      %v584 = vlaneseq
      %v585 = vshrl.u32 %v584, 7
      %v586 = vsub.s32 0, %v585
      %v587 = vrot.slane %v576, %v586
      %vm588 = vcmp.lt.s32.totalorder %v553, %v587
      %vm589 = vcmp.lt.s32.totalorder %v554, %v587
      %vm590 = vcmp.lt.s32.totalorder %v555, %v587
      %vm591 = vmand %vm581, %vm588
      %vm592 = vmand %vm582, %vm589
      %vm593 = vmand %vm583, %vm590
      %v594 = vsel %vm591, 1, 0
      %v595 = vsel %vm592, 1, 0
      %v596 = vsel %vm593, 1, 0
      %v597 = vcvt.s32.f32 %v594
      %v598 = vcvt.s32.f32 %v595
      %v599 = vcvt.s32.f32 %v596
      %v600 = vld [vmem:[%s536] sm:$0xff]
      %v601 = vld [vmem:[%s536 + $0x8] sm:$0xff]
      %v602 = vld [vmem:[%s536 + $0x10] sm:$0xff]
      %v603 = vld [vmem:[%s536 + $0x18] sm:$0xff]
      %v604 = vld [vmem:[%s536 + $0x20] sm:$0xff]
      %v605 = vld [vmem:[%s536 + $0x28] sm:$0xff]
      %v606 = vld [vmem:[%s536 + $0x30] sm:$0xff]
      %v607 = vld [vmem:[%s536 + $0x38] sm:$0xff]
      %v608 = vld [vmem:[%s536 + $0x40] sm:$0xff]
      %v609 = vld [vmem:[%s536 + $0x48] sm:$0xff]
      %v610 = vld [vmem:[%s536 + $0x50] sm:$0xff]
      %v611 = vld [vmem:[%s536 + $0x58] sm:$0xff]
      %v612 = vld [vmem:[%s536 + $0x60] sm:$0xff]
      %v613 = vld [vmem:[%s536 + $0x68] sm:$0xff]
      %v614 = vld [vmem:[%s536 + $0x70] sm:$0xff]
      %v615 = vld [vmem:[%s536 + $0x78] sm:$0xff]
      %v616 = vld [vmem:[%s508] sm:$0x1]
      %v617 = vsub.s32 %v616, %v573
      %v618 = vld [vmem:[%s521] sm:$0x1]
      %v619 = vsub.s32 %v618, %v573
      %v620 = vlaneseq
      %v621 = vshrl.u32 %v620, 7
      %v622 = vsub.s32 0, %v621
      %v623 = vrot.slane %v617, %v622
      %vm624 = vcmp.ge.s32.totalorder %v553, %v623
      %vm625 = vcmp.ge.s32.totalorder %v554, %v623
      %vm626 = vcmp.ge.s32.totalorder %v555, %v623
      %v627 = vlaneseq
      %v628 = vshrl.u32 %v627, 7
      %v629 = vsub.s32 0, %v628
      %v630 = vrot.slane %v619, %v629
      %vm631 = vcmp.lt.s32.totalorder %v553, %v630
      %vm632 = vcmp.lt.s32.totalorder %v554, %v630
      %vm633 = vcmp.lt.s32.totalorder %v555, %v630
      %vm634 = vmand %vm624, %vm631
      %vm635 = vmand %vm625, %vm632
      %vm636 = vmand %vm626, %vm633
      %v637 = vsel %vm634, 1, 0
      %v638 = vsel %vm635, 1, 0
      %v639 = vsel %vm636, 1, 0
      %v640 = vcvt.s32.f32 %v637
      %v641 = vcvt.s32.f32 %v638
      %v642 = vcvt.s32.f32 %v639
      %643 = vmatprep.subr.mxu0 0.0
      %644 = vmatpush1.msra.mxu0 %v600
      %645 = vmatprep.subr.mxu0 0.0
      %646 = vmatpush1.msra.mxu0 %v601
      %647 = vmatprep.subr.mxu0 0.0
      %648 = vmatpush1.msra.mxu0 %v602
      %649 = vmatprep.subr.mxu0 0.0
      %650 = vmatpush1.msra.mxu0 %v603
      %651 = vmatprep.subr.mxu0 0.0
      %652 = vmatpush1.msra.mxu0 %v604
      %653 = vmatprep.subr.mxu0 0.0
      %654 = vmatpush1.msra.mxu0 %v605
      %655 = vmatprep.subr.mxu0 0.0
      %656 = vmatpush1.msra.mxu0 %v606
      %657 = vmatprep.subr.mxu0 0.0
      %658 = vmatpush1.msra.mxu0 %v607
      %659 = vmatprep.subr.mxu0 0.0
      %660 = vmatpush1.msra.mxu0 %v608
      %661 = vmatprep.subr.mxu0 0.0
      %662 = vmatpush1.msra.mxu0 %v609
      %663 = vmatprep.subr.mxu0 0.0
      %664 = vmatpush1.msra.mxu0 %v610
      %665 = vmatprep.subr.mxu0 0.0
      %666 = vmatpush1.msra.mxu0 %v611
      %667 = vmatprep.subr.mxu0 0.0
      %668 = vmatpush1.msra.mxu0 %v612
      %669 = vmatprep.subr.mxu0 0.0
      %670 = vmatpush1.msra.mxu0 %v613
      %671 = vmatprep.subr.mxu0 0.0
      %672 = vmatpush1.msra.mxu0 %v614
      %673 = vmatprep.subr.mxu0 0.0
      %674 = vmatpush1.msra.mxu0 %v615
      %675 = vmatprep.subr.mxu0 0.0
      %676 = vmatpush1.msra.mxu0 0.0
      %677 = vmatprep.subr.mxu0 0.0
      %678 = vmatpush1.msra.mxu0 0.0
      %679 = vmatprep.subr.mxu0 0.0
      %680 = vmatpush1.msra.mxu0 0.0
      %681 = vmatprep.subr.mxu0 0.0
      %682 = vmatpush1.msra.mxu0 0.0
      %683 = vmatprep.subr.mxu0 0.0
      %684 = vmatpush1.msra.mxu0 0.0
      %685 = vmatprep.subr.mxu0 0.0
      %686 = vmatpush1.msra.mxu0 0.0
      %687 = vmatprep.subr.mxu0 0.0
      %688 = vmatpush1.msra.mxu0 0.0
      %689 = vmatprep.subr.mxu0 0.0
      %690 = vmatpush1.msra.mxu0 0.0
      %691 = vmatprep.subr.mxu0 0.0
      %692 = vmatpush1.msra.mxu0 0.0
      %693 = vmatprep.subr.mxu0 0.0
      %694 = vmatpush1.msra.mxu0 0.0
      %695 = vmatprep.subr.mxu0 0.0
      %696 = vmatpush1.msra.mxu0 0.0
      %697 = vmatprep.subr.mxu0 0.0
      %698 = vmatpush1.msra.mxu0 0.0
      %699 = vmatprep.subr.mxu0 0.0
      %700 = vmatpush1.msra.mxu0 0.0
      %701 = vmatprep.subr.mxu0 0.0
      %702 = vmatpush1.msra.mxu0 0.0
      %703 = vmatprep.subr.mxu0 0.0
      %704 = vmatpush1.msra.mxu0 0.0
      %705 = vmatprep.subr.mxu0 0.0
      %706 = vmatpush1.msra.mxu0 0.0
      %707 = vmatprep.mubr.f32.mxu0 0.0
      %708 = vmatmul.mubr.f32.gmra.mrb[0].mxu0 %v640
      %v709 = vpop.f32.mrb[0].mxu0
      %v710 = vadd.f32 0.0, %v709
      %v711 = vpop.f32.mrb[0].mxu0
      %712 = vmatprep.mubr.f32.mxu0 0.0
      %713 = vmatmul.mubr.f32.gmra.mrb[0].mxu0 %v641
      %v714 = vpop.f32.mrb[0].mxu0
      %v715 = vadd.f32 0.0, %v714
      %v716 = vpop.f32.mrb[0].mxu0
      %717 = vmatprep.mubr.f32.mxu0 0.0
      %718 = vmatmul.mubr.f32.gmra.mrb[0].mxu0 %v642
      %v719 = vpop.f32.mrb[0].mxu0
      %v720 = vadd.f32 0.0, %v719
      %v721 = vpop.f32.mrb[0].mxu0
      %722 = vdwg.mxu0
      %723 = vmatprep.subr.mxu0 0.0
      %724 = vmatpush1.msra.mxu0 %v556
      %725 = vmatprep.subr.mxu0 0.0
      %726 = vmatpush1.msra.mxu0 %v557
      %727 = vmatprep.subr.mxu0 0.0
      %728 = vmatpush1.msra.mxu0 %v558
      %729 = vmatprep.subr.mxu0 0.0
      %730 = vmatpush1.msra.mxu0 %v559
      %731 = vmatprep.subr.mxu0 0.0
      %732 = vmatpush1.msra.mxu0 %v560
      %733 = vmatprep.subr.mxu0 0.0
      %734 = vmatpush1.msra.mxu0 %v561
      %735 = vmatprep.subr.mxu0 0.0
      %736 = vmatpush1.msra.mxu0 %v562
      %737 = vmatprep.subr.mxu0 0.0
      %738 = vmatpush1.msra.mxu0 %v563
      %739 = vmatprep.subr.mxu0 0.0
      %740 = vmatpush1.msra.mxu0 %v564
      %741 = vmatprep.subr.mxu0 0.0
      %742 = vmatpush1.msra.mxu0 %v565
      %743 = vmatprep.subr.mxu0 0.0
      %744 = vmatpush1.msra.mxu0 %v566
      %745 = vmatprep.subr.mxu0 0.0
      %746 = vmatpush1.msra.mxu0 %v567
      %747 = vmatprep.subr.mxu0 0.0
      %748 = vmatpush1.msra.mxu0 %v568
      %749 = vmatprep.subr.mxu0 0.0
      %750 = vmatpush1.msra.mxu0 %v569
      %751 = vmatprep.subr.mxu0 0.0
      %752 = vmatpush1.msra.mxu0 %v570
      %753 = vmatprep.subr.mxu0 0.0
      %754 = vmatpush1.msra.mxu0 %v571
      %755 = vmatprep.subr.mxu0 0.0
      %756 = vmatpush1.msra.mxu0 0.0
      %757 = vmatprep.subr.mxu0 0.0
      %758 = vmatpush1.msra.mxu0 0.0
      %759 = vmatprep.subr.mxu0 0.0
      %760 = vmatpush1.msra.mxu0 0.0
      %761 = vmatprep.subr.mxu0 0.0
      %762 = vmatpush1.msra.mxu0 0.0
      %763 = vmatprep.subr.mxu0 0.0
      %764 = vmatpush1.msra.mxu0 0.0
      %765 = vmatprep.subr.mxu0 0.0
      %766 = vmatpush1.msra.mxu0 0.0
      %767 = vmatprep.subr.mxu0 0.0
      %768 = vmatpush1.msra.mxu0 0.0
      %769 = vmatprep.subr.mxu0 0.0
      %770 = vmatpush1.msra.mxu0 0.0
      %771 = vmatprep.subr.mxu0 0.0
      %772 = vmatpush1.msra.mxu0 0.0
      %773 = vmatprep.subr.mxu0 0.0
      %774 = vmatpush1.msra.mxu0 0.0
      %775 = vmatprep.subr.mxu0 0.0
      %776 = vmatpush1.msra.mxu0 0.0
      %777 = vmatprep.subr.mxu0 0.0
      %778 = vmatpush1.msra.mxu0 0.0
      %779 = vmatprep.subr.mxu0 0.0
      %780 = vmatpush1.msra.mxu0 0.0
      %781 = vmatprep.subr.mxu0 0.0
      %782 = vmatpush1.msra.mxu0 0.0
      %783 = vmatprep.subr.mxu0 0.0
      %784 = vmatpush1.msra.mxu0 0.0
      %785 = vmatprep.subr.mxu0 0.0
      %786 = vmatpush1.msra.mxu0 0.0
      %787 = vmatprep.mubr.f32.mxu0 0.0
      %788 = vmatmul.mubr.f32.gmra.mrb[0].mxu0 %v597
      %v789 = vpop.f32.mrb[0].mxu0
      %v790 = vadd.f32 %v710, %v789
      %v791 = vpop.f32.mrb[0].mxu0
      %792 = vmatprep.mubr.f32.mxu0 0.0
      %793 = vmatmul.mubr.f32.gmra.mrb[0].mxu0 %v598
      %v794 = vpop.f32.mrb[0].mxu0
      %v795 = vadd.f32 %v715, %v794
      %v796 = vpop.f32.mrb[0].mxu0
      %797 = vmatprep.mubr.f32.mxu0 0.0
      %798 = vmatmul.mubr.f32.gmra.mrb[0].mxu0 %v599
      %v799 = vpop.f32.mrb[0].mxu0
      %v800 = vadd.f32 %v720, %v799
      %v801 = vpop.f32.mrb[0].mxu0
      %802 = vdwg.mxu0
      %vm803 = vcmask 261120
      %804 = vst.msk [vmem:[%s549] sm:$0xff] %vm803, %v790
      %805 = vst.msk [vmem:[%s549 + $0x8] sm:$0xff] %vm803, %v795
      %806 = vst.msk [vmem:[%s549 + $0x10] sm:$0xff] %vm803, %v800
      %s807 = smul.u32 3, %s29
      %p808 = scmp.lt.s32.totalorder %s28, 1
      %s809 = scalar_select %p808, %s28, 1
      %p810 = scmp.lt.s32.totalorder %s807, 2
      %s811 = scalar_select %p810, %s807, 2
      %s812 = smul.addr %s809, 3
      %s813 = sadd.s32 %s811, %s812
      %s814 = smul.addr %s813, 8
      %s815 = scalar_lea.vmem %s7, %s814
      // Predicated region
      $region45: #{tpu_custom_call.1} parent=43 // pred_check
        %p816 = pneg %p254
      $region46: #{tpu_custom_call.1} parent=43 // pred_check_branch
        %818 = sbr.rel (%p816) target = $region48
      $region47: #{tpu_custom_call.1} parent=43 // pred_region
        %s819 = smul.u32 3, %s29
      $region48: #{tpu_custom_call.1} parent=43 // pred_fallthru
        _
    $region44: #{tpu_custom_call.1} parent=5 // pred_fallthru
      _
    %p820 = scmp.le.s32.totalorder 2, %s19
    // Predicated region
    $region49: #{tpu_custom_call.1} parent=5 // pred_check
      %p821 = pneg %p820
    $region50: #{tpu_custom_call.1} parent=5 // pred_check_branch
      %823 = sbr.rel (%p821) target = $region52
    $region51: #{tpu_custom_call.1} parent=5 // pred_region
      %s824 = ssub.s32 %s19, 2
      // Predicated region
      $region53: #{tpu_custom_call.1} parent=51 // pred_check
        %p825 = pneg %p260
      $region54: #{tpu_custom_call.1} parent=51 // pred_check_branch
        %827 = sbr.rel (%p825) target = $region56
      $region55: #{tpu_custom_call.1} parent=51 // pred_region
        %s828 = smul.u32 3, %s31
        %p829 = scmp.lt.s32.totalorder %s30, 1
        %s830 = scalar_select %p829, %s30, 1
        %p831 = scmp.lt.s32.totalorder %s828, 2
        %s832 = scalar_select %p831, %s828, 2
        %s833 = smul.addr %s830, 3
        %s834 = sadd.s32 %s832, %s833
        %s835 = smul.addr %s834, 8
        %s836 = scalar_lea.vmem %s7, %s835
      $region56: #{tpu_custom_call.1} parent=51 // pred_fallthru
        _
    $region52: #{tpu_custom_call.1} parent=5 // pred_fallthru
      _
  $region6: #{tpu_custom_call.1} parent=0 // loop_footer
    %s23 = sadd.s32 1, %s19
  $region7: #{tpu_custom_call.1} parent=0 // loop_footer_branch
    %18 = sbr.rel target = $region3
  $region8: #{tpu_custom_call.1} parent=0 // loop_exit
    _

</llo_original>
